<compile_context>
chip_gen: v5e
topology: v5e:2x2
jax: 0.10.0
libtpu: 0.0.40
codegen_flags: <defaults>
</compile_context>

<pallas_src>
import functools

import jax
import jax.numpy as jnp
from jax.experimental import pallas as pl
from jax.experimental.pallas import tpu as pltpu

# Layer dims (in_features, out_features) -- mirrors the PyTorch module.
DIMS = ((6, 3), (3, 4), (4, 7), (7, 5), (5, 2))
NUM_LAYERS = len(DIMS)
IN_DIM = DIMS[0][0]
OUT_DIM = DIMS[-1][1]

LANES = 128                              # padded feature axis (one vreg lane row)
W_ROWS = 8                               # each padded weight uses 8 sublanes (max fan_in = 7)
BIAS_ROW0 = NUM_LAYERS * W_ROWS          # 40: biases start here, one row each
SLAB_ROWS = BIAS_ROW0 + W_ROWS           # 48 total rows (45..47 zero padding)


def _sigmoid(z):
    # exp and the approximate reciprocal both issue on the otherwise-idle EUP
    # slot; a single Newton step (VPU) restores ~f32 accuracy.
    z = jnp.clip(z, -30.0, 30.0)
    d = 1.0 + jnp.exp(-z)
    r = pl.reciprocal(d, approx=True)
    return r * (2.0 - d * r)


def net2_kernel(x_ref, slab_ref, o_ref):
    tb = x_ref.shape[0]
    slab = slab_ref[...]                      # (48, 128) f32, resident in VMEM
    h = x_ref[...].astype(jnp.float32)        # (TB, 6)

    for layer, (k_real, _) in enumerate(DIMS):
        w = slab[layer * W_ROWS:(layer + 1) * W_ROWS, :]        # (8, 128), zero-padded
        b = slab[BIAS_ROW0 + layer:BIAS_ROW0 + layer + 1, :]    # (1, 128), zero-padded
        # VPU path: out[r, :] = bias + sum_k h[r, k] * w[k, :]
        acc = jnp.broadcast_to(b, (tb, LANES))
        for k in range(k_real):               # k_real <= 7, fully unrolled at trace time
            acc = acc + h[:, k:k + 1] * w[k:k + 1, :]
        if layer in (0, 2):
            h = _sigmoid(acc)                 # fc1, fc3
        elif layer == 1:
            h = jnp.maximum(acc, 0.0)         # fc2: relu
        elif layer == 3:
            h = jnp.tanh(acc)                 # fc4
        else:
            h = acc                           # fc5: identity
        # Padded lanes of h are never contracted (next layer only reads its
        # first k_real lanes), so activation(0) values there are harmless.

    o_ref[...] = h.astype(o_ref.dtype)        # lane-dense (TB, 128) store


def pack_params(params):
    """Pack [(W (in,out), b (1,out)) x 5] into one zero-padded (48, 128) slab."""
    slab = jnp.zeros((SLAB_ROWS, LANES), jnp.float32)
    for layer, (w, b) in enumerate(params):
        k, n = w.shape
        slab = slab.at[layer * W_ROWS:layer * W_ROWS + k, :n].set(
            w.astype(jnp.float32))
        slab = slab.at[BIAS_ROW0 + layer, :n].set(
            b.reshape(-1).astype(jnp.float32))
    return slab


@functools.partial(jax.jit, static_argnames=("block_batch",))
def net2_forward(x, slab, *, block_batch=256):
    """x: (B, 6) f32; slab: (48, 128) packed params. Returns (B, 2) f32."""
    batch = x.shape[0]
    # Batch tile: full batch when small, otherwise 256 rows (f32) -- safely
    # inside v7x's 64 MiB VMEM even with double-buffered (TB, 128) tiles.
    tb = batch if batch <= block_batch else block_batch
    grid = (pl.cdiv(batch, tb),)

    out_padded = pl.pallas_call(
        net2_kernel,
        out_shape=jax.ShapeDtypeStruct((batch, LANES), jnp.float32),
        grid=grid,
        in_specs=[
            pl.BlockSpec((tb, IN_DIM), lambda i: (i, 0)),        # activations
            pl.BlockSpec((SLAB_ROWS, LANES), lambda i: (0, 0)),  # params, resident
        ],
        out_specs=pl.BlockSpec((tb, LANES), lambda i: (i, 0)),
        compiler_params=pltpu.CompilerParams(
            dimension_semantics=("parallel",),   # shards batch across v7x's 2 TCs
        ),
    )(x, slab)
    return out_padded[:, :OUT_DIM]


def init_params(key):
    """Deterministic init mimicking PyTorch Linear default (uniform +/- 1/sqrt(fan_in)),
    with W stored as (in, out) so layers compute x @ W + b."""
    params = []
    for (fan_in, fan_out) in DIMS:
        key, kw, kb = jax.random.split(key, 3)
        bound = 1.0 / jnp.sqrt(float(fan_in))
        w = jax.random.uniform(kw, (fan_in, fan_out), jnp.float32, -bound, bound)
        b = jax.random.uniform(kb, (1, fan_out), jnp.float32, -bound, bound)
        params.append((w, b))
    return params


def net2_reference(x, params):
    """Plain-JAX reference for the correctness check."""
    h = jax.nn.sigmoid(x @ params[0][0] + params[0][1])
    h = jnp.maximum(h @ params[1][0] + params[1][1], 0.0)
    h = jax.nn.sigmoid(h @ params[2][0] + params[2][1])
    h = jnp.tanh(h @ params[3][0] + params[3][1])
    h = h @ params[4][0] + params[4][1]
    return h


if __name__ == "__main__":
    key = jax.random.PRNGKey(0)
    key, kx = jax.random.split(key)

    batch = 8
    x = jax.random.normal(kx, (batch, IN_DIM), jnp.float32)
    params = init_params(key)
    slab = pack_params(params)

    out = net2_forward(x, slab)
    out = jax.block_until_ready(out)

    ref = net2_reference(x, params)
    assert out.shape == (batch, OUT_DIM), out.shape
    max_err = jnp.max(jnp.abs(out - ref))
    # Tolerance leaves headroom for the EUP approximate-reciprocal sigmoid
    # (refined by one Newton step to ~f32 accuracy).
    assert jnp.allclose(out, ref, atol=1e-4, rtol=1e-4), f"max abs err = {max_err}"

    print("KERNEL_OK")
</pallas_src>

<mosaic_0001>
module attributes {stable_mosaic.version = 11 : i64} {
  func.func @net2_kernel(%arg0: i32, %arg1: memref<8x6xf32, #tpu.memory_space<vmem>>, %arg2: memref<48x128xf32, #tpu.memory_space<vmem>>, %arg3: memref<8x128xf32, #tpu.memory_space<vmem>>) attributes {dimension_semantics = [#tpu.dimension_semantics<parallel>], iteration_bounds = array<i64: 1>, scalar_prefetch = 0 : i64, scratch_operands = 0 : i64, tpu.core_type = #tpu.core_type<tc>, window_params = [{transform_indices = @transform_0, window_bounds = array<i64: 8, 6>}, {pipeline_mode = #tpu.pipeline_mode<synchronous>, transform_indices = @transform_1, window_bounds = array<i64: 48, 128>}, {transform_indices = @transform_2, window_bounds = array<i64: 8, 128>}]} {
    %c0 = arith.constant 0 : index
    %c0_0 = arith.constant 0 : index
    %0 = vector.load %arg2[%c0, %c0_0] : memref<48x128xf32, #tpu.memory_space<vmem>>, vector<48x128xf32>
    %c0_1 = arith.constant 0 : index
    %c0_2 = arith.constant 0 : index
    %1 = vector.load %arg1[%c0_1, %c0_2] : memref<8x6xf32, #tpu.memory_space<vmem>>, vector<8x6xf32>
    %2 = vector.extract_strided_slice %0 {offsets = [0, 0], sizes = [8, 128], strides = [1, 1]} : vector<48x128xf32> to vector<8x128xf32>
    %3 = vector.extract_strided_slice %0 {offsets = [40, 0], sizes = [1, 128], strides = [1, 1]} : vector<48x128xf32> to vector<1x128xf32>
    %4 = vector.shape_cast %3 : vector<1x128xf32> to vector<1x128xf32>
    %5 = vector.broadcast %4 : vector<1x128xf32> to vector<8x128xf32>
    %6 = vector.extract_strided_slice %1 {offsets = [0, 0], sizes = [8, 1], strides = [1, 1]} : vector<8x6xf32> to vector<8x1xf32>
    %7 = vector.extract_strided_slice %2 {offsets = [0, 0], sizes = [1, 128], strides = [1, 1]} : vector<8x128xf32> to vector<1x128xf32>
    %8 = vector.broadcast %6 : vector<8x1xf32> to vector<8x128xf32>
    %9 = vector.broadcast %7 : vector<1x128xf32> to vector<8x128xf32>
    %10 = arith.mulf %8, %9 : vector<8x128xf32>
    %11 = arith.addf %5, %10 : vector<8x128xf32>
    %12 = vector.extract_strided_slice %1 {offsets = [0, 1], sizes = [8, 1], strides = [1, 1]} : vector<8x6xf32> to vector<8x1xf32>
    %13 = vector.extract_strided_slice %2 {offsets = [1, 0], sizes = [1, 128], strides = [1, 1]} : vector<8x128xf32> to vector<1x128xf32>
    %14 = vector.broadcast %12 : vector<8x1xf32> to vector<8x128xf32>
    %15 = vector.broadcast %13 : vector<1x128xf32> to vector<8x128xf32>
    %16 = arith.mulf %14, %15 : vector<8x128xf32>
    %17 = arith.addf %11, %16 : vector<8x128xf32>
    %18 = vector.extract_strided_slice %1 {offsets = [0, 2], sizes = [8, 1], strides = [1, 1]} : vector<8x6xf32> to vector<8x1xf32>
    %19 = vector.extract_strided_slice %2 {offsets = [2, 0], sizes = [1, 128], strides = [1, 1]} : vector<8x128xf32> to vector<1x128xf32>
    %20 = vector.broadcast %18 : vector<8x1xf32> to vector<8x128xf32>
    %21 = vector.broadcast %19 : vector<1x128xf32> to vector<8x128xf32>
    %22 = arith.mulf %20, %21 : vector<8x128xf32>
    %23 = arith.addf %17, %22 : vector<8x128xf32>
    %24 = vector.extract_strided_slice %1 {offsets = [0, 3], sizes = [8, 1], strides = [1, 1]} : vector<8x6xf32> to vector<8x1xf32>
    %25 = vector.extract_strided_slice %2 {offsets = [3, 0], sizes = [1, 128], strides = [1, 1]} : vector<8x128xf32> to vector<1x128xf32>
    %26 = vector.broadcast %24 : vector<8x1xf32> to vector<8x128xf32>
    %27 = vector.broadcast %25 : vector<1x128xf32> to vector<8x128xf32>
    %28 = arith.mulf %26, %27 : vector<8x128xf32>
    %29 = arith.addf %23, %28 : vector<8x128xf32>
    %30 = vector.extract_strided_slice %1 {offsets = [0, 4], sizes = [8, 1], strides = [1, 1]} : vector<8x6xf32> to vector<8x1xf32>
    %31 = vector.extract_strided_slice %2 {offsets = [4, 0], sizes = [1, 128], strides = [1, 1]} : vector<8x128xf32> to vector<1x128xf32>
    %32 = vector.broadcast %30 : vector<8x1xf32> to vector<8x128xf32>
    %33 = vector.broadcast %31 : vector<1x128xf32> to vector<8x128xf32>
    %34 = arith.mulf %32, %33 : vector<8x128xf32>
    %35 = arith.addf %29, %34 : vector<8x128xf32>
    %36 = vector.extract_strided_slice %1 {offsets = [0, 5], sizes = [8, 1], strides = [1, 1]} : vector<8x6xf32> to vector<8x1xf32>
    %37 = vector.extract_strided_slice %2 {offsets = [5, 0], sizes = [1, 128], strides = [1, 1]} : vector<8x128xf32> to vector<1x128xf32>
    %38 = vector.broadcast %36 : vector<8x1xf32> to vector<8x128xf32>
    %39 = vector.broadcast %37 : vector<1x128xf32> to vector<8x128xf32>
    %40 = arith.mulf %38, %39 : vector<8x128xf32>
    %41 = arith.addf %35, %40 : vector<8x128xf32>
    %cst = arith.constant -3.000000e+01 : f32
    %cst_3 = arith.constant 3.000000e+01 : f32
    %42 = vector.broadcast %cst : f32 to vector<8x128xf32>
    %43 = arith.maximumf %42, %41 : vector<8x128xf32>
    %44 = vector.broadcast %cst_3 : f32 to vector<8x128xf32>
    %45 = arith.minimumf %44, %43 : vector<8x128xf32>
    %cst_4 = arith.constant 0.000000e+00 : f32
    %46 = vector.broadcast %cst_4 : f32 to vector<8x128xf32>
    %47 = arith.subf %46, %45 : vector<8x128xf32>
    %48 = math.exp %47 : vector<8x128xf32>
    %cst_5 = arith.constant 1.000000e+00 : f32
    %49 = vector.broadcast %cst_5 : f32 to vector<8x128xf32>
    %50 = arith.addf %49, %48 : vector<8x128xf32>
    %51 = tpu.reciprocal %50 {approx = true} : vector<8x128xf32> -> vector<8x128xf32>
    %52 = arith.mulf %50, %51 : vector<8x128xf32>
    %cst_6 = arith.constant 2.000000e+00 : f32
    %53 = vector.broadcast %cst_6 : f32 to vector<8x128xf32>
    %54 = arith.subf %53, %52 : vector<8x128xf32>
    %55 = arith.mulf %51, %54 : vector<8x128xf32>
    %56 = vector.extract_strided_slice %0 {offsets = [8, 0], sizes = [8, 128], strides = [1, 1]} : vector<48x128xf32> to vector<8x128xf32>
    %57 = vector.extract_strided_slice %0 {offsets = [41, 0], sizes = [1, 128], strides = [1, 1]} : vector<48x128xf32> to vector<1x128xf32>
    %58 = vector.shape_cast %57 : vector<1x128xf32> to vector<1x128xf32>
    %59 = vector.broadcast %58 : vector<1x128xf32> to vector<8x128xf32>
    %60 = vector.extract_strided_slice %55 {offsets = [0, 0], sizes = [8, 1], strides = [1, 1]} : vector<8x128xf32> to vector<8x1xf32>
    %61 = vector.extract_strided_slice %56 {offsets = [0, 0], sizes = [1, 128], strides = [1, 1]} : vector<8x128xf32> to vector<1x128xf32>
    %62 = vector.broadcast %60 : vector<8x1xf32> to vector<8x128xf32>
    %63 = vector.broadcast %61 : vector<1x128xf32> to vector<8x128xf32>
    %64 = arith.mulf %62, %63 : vector<8x128xf32>
    %65 = arith.addf %59, %64 : vector<8x128xf32>
    %66 = vector.extract_strided_slice %55 {offsets = [0, 1], sizes = [8, 1], strides = [1, 1]} : vector<8x128xf32> to vector<8x1xf32>
    %67 = vector.extract_strided_slice %56 {offsets = [1, 0], sizes = [1, 128], strides = [1, 1]} : vector<8x128xf32> to vector<1x128xf32>
    %68 = vector.broadcast %66 : vector<8x1xf32> to vector<8x128xf32>
    %69 = vector.broadcast %67 : vector<1x128xf32> to vector<8x128xf32>
    %70 = arith.mulf %68, %69 : vector<8x128xf32>
    %71 = arith.addf %65, %70 : vector<8x128xf32>
    %72 = vector.extract_strided_slice %55 {offsets = [0, 2], sizes = [8, 1], strides = [1, 1]} : vector<8x128xf32> to vector<8x1xf32>
    %73 = vector.extract_strided_slice %56 {offsets = [2, 0], sizes = [1, 128], strides = [1, 1]} : vector<8x128xf32> to vector<1x128xf32>
    %74 = vector.broadcast %72 : vector<8x1xf32> to vector<8x128xf32>
    %75 = vector.broadcast %73 : vector<1x128xf32> to vector<8x128xf32>
    %76 = arith.mulf %74, %75 : vector<8x128xf32>
    %77 = arith.addf %71, %76 : vector<8x128xf32>
    %cst_7 = arith.constant 0.000000e+00 : f32
    %78 = vector.broadcast %cst_7 : f32 to vector<8x128xf32>
    %79 = arith.maximumf %77, %78 : vector<8x128xf32>
    %80 = vector.extract_strided_slice %0 {offsets = [16, 0], sizes = [8, 128], strides = [1, 1]} : vector<48x128xf32> to vector<8x128xf32>
    %81 = vector.extract_strided_slice %0 {offsets = [42, 0], sizes = [1, 128], strides = [1, 1]} : vector<48x128xf32> to vector<1x128xf32>
    %82 = vector.shape_cast %81 : vector<1x128xf32> to vector<1x128xf32>
    %83 = vector.broadcast %82 : vector<1x128xf32> to vector<8x128xf32>
    %84 = vector.extract_strided_slice %79 {offsets = [0, 0], sizes = [8, 1], strides = [1, 1]} : vector<8x128xf32> to vector<8x1xf32>
    %85 = vector.extract_strided_slice %80 {offsets = [0, 0], sizes = [1, 128], strides = [1, 1]} : vector<8x128xf32> to vector<1x128xf32>
    %86 = vector.broadcast %84 : vector<8x1xf32> to vector<8x128xf32>
    %87 = vector.broadcast %85 : vector<1x128xf32> to vector<8x128xf32>
    %88 = arith.mulf %86, %87 : vector<8x128xf32>
    %89 = arith.addf %83, %88 : vector<8x128xf32>
    %90 = vector.extract_strided_slice %79 {offsets = [0, 1], sizes = [8, 1], strides = [1, 1]} : vector<8x128xf32> to vector<8x1xf32>
    %91 = vector.extract_strided_slice %80 {offsets = [1, 0], sizes = [1, 128], strides = [1, 1]} : vector<8x128xf32> to vector<1x128xf32>
    %92 = vector.broadcast %90 : vector<8x1xf32> to vector<8x128xf32>
    %93 = vector.broadcast %91 : vector<1x128xf32> to vector<8x128xf32>
    %94 = arith.mulf %92, %93 : vector<8x128xf32>
    %95 = arith.addf %89, %94 : vector<8x128xf32>
    %96 = vector.extract_strided_slice %79 {offsets = [0, 2], sizes = [8, 1], strides = [1, 1]} : vector<8x128xf32> to vector<8x1xf32>
    %97 = vector.extract_strided_slice %80 {offsets = [2, 0], sizes = [1, 128], strides = [1, 1]} : vector<8x128xf32> to vector<1x128xf32>
    %98 = vector.broadcast %96 : vector<8x1xf32> to vector<8x128xf32>
    %99 = vector.broadcast %97 : vector<1x128xf32> to vector<8x128xf32>
    %100 = arith.mulf %98, %99 : vector<8x128xf32>
    %101 = arith.addf %95, %100 : vector<8x128xf32>
    %102 = vector.extract_strided_slice %79 {offsets = [0, 3], sizes = [8, 1], strides = [1, 1]} : vector<8x128xf32> to vector<8x1xf32>
    %103 = vector.extract_strided_slice %80 {offsets = [3, 0], sizes = [1, 128], strides = [1, 1]} : vector<8x128xf32> to vector<1x128xf32>
    %104 = vector.broadcast %102 : vector<8x1xf32> to vector<8x128xf32>
    %105 = vector.broadcast %103 : vector<1x128xf32> to vector<8x128xf32>
    %106 = arith.mulf %104, %105 : vector<8x128xf32>
    %107 = arith.addf %101, %106 : vector<8x128xf32>
    %cst_8 = arith.constant -3.000000e+01 : f32
    %cst_9 = arith.constant 3.000000e+01 : f32
    %108 = vector.broadcast %cst_8 : f32 to vector<8x128xf32>
    %109 = arith.maximumf %108, %107 : vector<8x128xf32>
    %110 = vector.broadcast %cst_9 : f32 to vector<8x128xf32>
    %111 = arith.minimumf %110, %109 : vector<8x128xf32>
    %cst_10 = arith.constant 0.000000e+00 : f32
    %112 = vector.broadcast %cst_10 : f32 to vector<8x128xf32>
    %113 = arith.subf %112, %111 : vector<8x128xf32>
    %114 = math.exp %113 : vector<8x128xf32>
    %cst_11 = arith.constant 1.000000e+00 : f32
    %115 = vector.broadcast %cst_11 : f32 to vector<8x128xf32>
    %116 = arith.addf %115, %114 : vector<8x128xf32>
    %117 = tpu.reciprocal %116 {approx = true} : vector<8x128xf32> -> vector<8x128xf32>
    %118 = arith.mulf %116, %117 : vector<8x128xf32>
    %cst_12 = arith.constant 2.000000e+00 : f32
    %119 = vector.broadcast %cst_12 : f32 to vector<8x128xf32>
    %120 = arith.subf %119, %118 : vector<8x128xf32>
    %121 = arith.mulf %117, %120 : vector<8x128xf32>
    %122 = vector.extract_strided_slice %0 {offsets = [24, 0], sizes = [8, 128], strides = [1, 1]} : vector<48x128xf32> to vector<8x128xf32>
    %123 = vector.extract_strided_slice %0 {offsets = [43, 0], sizes = [1, 128], strides = [1, 1]} : vector<48x128xf32> to vector<1x128xf32>
    %124 = vector.shape_cast %123 : vector<1x128xf32> to vector<1x128xf32>
    %125 = vector.broadcast %124 : vector<1x128xf32> to vector<8x128xf32>
    %126 = vector.extract_strided_slice %121 {offsets = [0, 0], sizes = [8, 1], strides = [1, 1]} : vector<8x128xf32> to vector<8x1xf32>
    %127 = vector.extract_strided_slice %122 {offsets = [0, 0], sizes = [1, 128], strides = [1, 1]} : vector<8x128xf32> to vector<1x128xf32>
    %128 = vector.broadcast %126 : vector<8x1xf32> to vector<8x128xf32>
    %129 = vector.broadcast %127 : vector<1x128xf32> to vector<8x128xf32>
    %130 = arith.mulf %128, %129 : vector<8x128xf32>
    %131 = arith.addf %125, %130 : vector<8x128xf32>
    %132 = vector.extract_strided_slice %121 {offsets = [0, 1], sizes = [8, 1], strides = [1, 1]} : vector<8x128xf32> to vector<8x1xf32>
    %133 = vector.extract_strided_slice %122 {offsets = [1, 0], sizes = [1, 128], strides = [1, 1]} : vector<8x128xf32> to vector<1x128xf32>
    %134 = vector.broadcast %132 : vector<8x1xf32> to vector<8x128xf32>
    %135 = vector.broadcast %133 : vector<1x128xf32> to vector<8x128xf32>
    %136 = arith.mulf %134, %135 : vector<8x128xf32>
    %137 = arith.addf %131, %136 : vector<8x128xf32>
    %138 = vector.extract_strided_slice %121 {offsets = [0, 2], sizes = [8, 1], strides = [1, 1]} : vector<8x128xf32> to vector<8x1xf32>
    %139 = vector.extract_strided_slice %122 {offsets = [2, 0], sizes = [1, 128], strides = [1, 1]} : vector<8x128xf32> to vector<1x128xf32>
    %140 = vector.broadcast %138 : vector<8x1xf32> to vector<8x128xf32>
    %141 = vector.broadcast %139 : vector<1x128xf32> to vector<8x128xf32>
    %142 = arith.mulf %140, %141 : vector<8x128xf32>
    %143 = arith.addf %137, %142 : vector<8x128xf32>
    %144 = vector.extract_strided_slice %121 {offsets = [0, 3], sizes = [8, 1], strides = [1, 1]} : vector<8x128xf32> to vector<8x1xf32>
    %145 = vector.extract_strided_slice %122 {offsets = [3, 0], sizes = [1, 128], strides = [1, 1]} : vector<8x128xf32> to vector<1x128xf32>
    %146 = vector.broadcast %144 : vector<8x1xf32> to vector<8x128xf32>
    %147 = vector.broadcast %145 : vector<1x128xf32> to vector<8x128xf32>
    %148 = arith.mulf %146, %147 : vector<8x128xf32>
    %149 = arith.addf %143, %148 : vector<8x128xf32>
    %150 = vector.extract_strided_slice %121 {offsets = [0, 4], sizes = [8, 1], strides = [1, 1]} : vector<8x128xf32> to vector<8x1xf32>
    %151 = vector.extract_strided_slice %122 {offsets = [4, 0], sizes = [1, 128], strides = [1, 1]} : vector<8x128xf32> to vector<1x128xf32>
    %152 = vector.broadcast %150 : vector<8x1xf32> to vector<8x128xf32>
    %153 = vector.broadcast %151 : vector<1x128xf32> to vector<8x128xf32>
    %154 = arith.mulf %152, %153 : vector<8x128xf32>
    %155 = arith.addf %149, %154 : vector<8x128xf32>
    %156 = vector.extract_strided_slice %121 {offsets = [0, 5], sizes = [8, 1], strides = [1, 1]} : vector<8x128xf32> to vector<8x1xf32>
    %157 = vector.extract_strided_slice %122 {offsets = [5, 0], sizes = [1, 128], strides = [1, 1]} : vector<8x128xf32> to vector<1x128xf32>
    %158 = vector.broadcast %156 : vector<8x1xf32> to vector<8x128xf32>
    %159 = vector.broadcast %157 : vector<1x128xf32> to vector<8x128xf32>
    %160 = arith.mulf %158, %159 : vector<8x128xf32>
    %161 = arith.addf %155, %160 : vector<8x128xf32>
    %162 = vector.extract_strided_slice %121 {offsets = [0, 6], sizes = [8, 1], strides = [1, 1]} : vector<8x128xf32> to vector<8x1xf32>
    %163 = vector.extract_strided_slice %122 {offsets = [6, 0], sizes = [1, 128], strides = [1, 1]} : vector<8x128xf32> to vector<1x128xf32>
    %164 = vector.broadcast %162 : vector<8x1xf32> to vector<8x128xf32>
    %165 = vector.broadcast %163 : vector<1x128xf32> to vector<8x128xf32>
    %166 = arith.mulf %164, %165 : vector<8x128xf32>
    %167 = arith.addf %161, %166 : vector<8x128xf32>
    %168 = math.tanh %167 : vector<8x128xf32>
    %169 = vector.extract_strided_slice %0 {offsets = [32, 0], sizes = [8, 128], strides = [1, 1]} : vector<48x128xf32> to vector<8x128xf32>
    %170 = vector.extract_strided_slice %0 {offsets = [44, 0], sizes = [1, 128], strides = [1, 1]} : vector<48x128xf32> to vector<1x128xf32>
    %171 = vector.shape_cast %170 : vector<1x128xf32> to vector<1x128xf32>
    %172 = vector.broadcast %171 : vector<1x128xf32> to vector<8x128xf32>
    %173 = vector.extract_strided_slice %168 {offsets = [0, 0], sizes = [8, 1], strides = [1, 1]} : vector<8x128xf32> to vector<8x1xf32>
    %174 = vector.extract_strided_slice %169 {offsets = [0, 0], sizes = [1, 128], strides = [1, 1]} : vector<8x128xf32> to vector<1x128xf32>
    %175 = vector.broadcast %173 : vector<8x1xf32> to vector<8x128xf32>
    %176 = vector.broadcast %174 : vector<1x128xf32> to vector<8x128xf32>
    %177 = arith.mulf %175, %176 : vector<8x128xf32>
    %178 = arith.addf %172, %177 : vector<8x128xf32>
    %179 = vector.extract_strided_slice %168 {offsets = [0, 1], sizes = [8, 1], strides = [1, 1]} : vector<8x128xf32> to vector<8x1xf32>
    %180 = vector.extract_strided_slice %169 {offsets = [1, 0], sizes = [1, 128], strides = [1, 1]} : vector<8x128xf32> to vector<1x128xf32>
    %181 = vector.broadcast %179 : vector<8x1xf32> to vector<8x128xf32>
    %182 = vector.broadcast %180 : vector<1x128xf32> to vector<8x128xf32>
    %183 = arith.mulf %181, %182 : vector<8x128xf32>
    %184 = arith.addf %178, %183 : vector<8x128xf32>
    %185 = vector.extract_strided_slice %168 {offsets = [0, 2], sizes = [8, 1], strides = [1, 1]} : vector<8x128xf32> to vector<8x1xf32>
    %186 = vector.extract_strided_slice %169 {offsets = [2, 0], sizes = [1, 128], strides = [1, 1]} : vector<8x128xf32> to vector<1x128xf32>
    %187 = vector.broadcast %185 : vector<8x1xf32> to vector<8x128xf32>
    %188 = vector.broadcast %186 : vector<1x128xf32> to vector<8x128xf32>
    %189 = arith.mulf %187, %188 : vector<8x128xf32>
    %190 = arith.addf %184, %189 : vector<8x128xf32>
    %191 = vector.extract_strided_slice %168 {offsets = [0, 3], sizes = [8, 1], strides = [1, 1]} : vector<8x128xf32> to vector<8x1xf32>
    %192 = vector.extract_strided_slice %169 {offsets = [3, 0], sizes = [1, 128], strides = [1, 1]} : vector<8x128xf32> to vector<1x128xf32>
    %193 = vector.broadcast %191 : vector<8x1xf32> to vector<8x128xf32>
    %194 = vector.broadcast %192 : vector<1x128xf32> to vector<8x128xf32>
    %195 = arith.mulf %193, %194 : vector<8x128xf32>
    %196 = arith.addf %190, %195 : vector<8x128xf32>
    %197 = vector.extract_strided_slice %168 {offsets = [0, 4], sizes = [8, 1], strides = [1, 1]} : vector<8x128xf32> to vector<8x1xf32>
    %198 = vector.extract_strided_slice %169 {offsets = [4, 0], sizes = [1, 128], strides = [1, 1]} : vector<8x128xf32> to vector<1x128xf32>
    %199 = vector.broadcast %197 : vector<8x1xf32> to vector<8x128xf32>
    %200 = vector.broadcast %198 : vector<1x128xf32> to vector<8x128xf32>
    %201 = arith.mulf %199, %200 : vector<8x128xf32>
    %202 = arith.addf %196, %201 : vector<8x128xf32>
    %c0_13 = arith.constant 0 : index
    %c0_14 = arith.constant 0 : index
    %203 = vector.load %arg3[%c0_13, %c0_14] : memref<8x128xf32, #tpu.memory_space<vmem>>, vector<8x128xf32>
    tpu.vector_store %arg3[%c0_13, %c0_14], %202 {strides = array<i32>} : memref<8x128xf32, #tpu.memory_space<vmem>>, vector<8x128xf32>,
    return
  }
  func.func @transform_0(%arg0: i32) -> (i32, i32) {
    %c0_i32 = arith.constant 0 : i32
    %c0_i32_0 = arith.constant 0 : i32
    return %arg0, %c0_i32 : i32, i32
  }
  func.func @transform_1(%arg0: i32) -> (i32, i32) {
    %c0_i32 = arith.constant 0 : i32
    %c0_i32_0 = arith.constant 0 : i32
    %c0_i32_1 = arith.constant 0 : i32
    return %c0_i32, %c0_i32_0 : i32, i32
  }
  func.func @transform_2(%arg0: i32) -> (i32, i32) {
    %c0_i32 = arith.constant 0 : i32
    %c0_i32_0 = arith.constant 0 : i32
    return %arg0, %c0_i32 : i32, i32
  }
}

</mosaic_0001>

<llo_original>
// kernel: net2_forward.1
$region0: #{net2_forward.1}
  #allocation0 [shape = 'u32[]', space=smem, size = 0x4, offset = 0x4, fixed_abs, tag = 'smem constant byte address 0x4 - core index']
  #allocation1 [shape = 'u32[72,128]{1,0:T(1,128)}', space=vmem, size = 0x9000, scoped, tag = 'internal scratch']
  %s0 = inlined_call_operand.hbm [shape: f32[8,6], index: 0, kind: input, shape index: {}]
  %s1 = inlined_call_operand.hbm [shape: f32[48,128], index: 1, kind: input, shape index: {}]
  %s2 = inlined_call_operand.vmem [shape: f32[8,128], index: 2, kind: output, shape index: {}]
  %s3 = sld [smem:[#allocation0]]
  $region26: #{net2_forward.1} parent=0
    _
  %s5 = ssub.s32 1, %s3
  %s6 = scalar_select 0, %s5, %s3
  $region1: #{net2_forward.1} parent=0
    #allocation2 [shape = 'u8[4096]{0}', space=vmem, size = 0x1000, scoped, tag = 'input window, operand 0, single buffered']
    #allocation3 [shape = 's32[1]{0}', space=sflag, size = 0x4, scoped, tag = 'scoped memory for net2_forward.1']
    #allocation4 [shape = 'u8[24576]{0}', space=vmem, size = 0x6000, scoped, tag = 'input window, operand 1, single buffered']
    #allocation5 [shape = 's32[1]{0}', space=sflag, size = 0x4, scoped, tag = 'scoped memory for net2_forward.1']
    %7 = vsyncpa [#allocation3], 0
    %8 = vsyncpa [#allocation5], 0
    // Predicated region
    $region2: #{net2_forward.1} parent=1 // pred_check
      _
    $region3: #{net2_forward.1} parent=1 // pred_check_branch
      %10 = sbr.rel (0) target = $region5
    $region4: #{net2_forward.1} parent=1 // pred_region
      %12 = vsyncadd [#allocation3], 0
      %s14 = sshll.u32 %s0, 4
      %s15 = int_to_ptr.hbm [resolvable:$true] %s14
      %s16 = sshll.u32 [#allocation2], 4
      %s17 = int_to_ptr.vmem [resolvable:$true] %s16
      %19 = dma.hbm_to_vmem [thread:$0]  %s15, 128, %s17, [#allocation3]
    $region5: #{net2_forward.1} parent=1 // pred_fallthru
      _
    // Predicated region
    $region6: #{net2_forward.1} parent=1 // pred_check
      _
    $region7: #{net2_forward.1} parent=1 // pred_check_branch
      %21 = sbr.rel (0) target = $region9
    $region8: #{net2_forward.1} parent=1 // pred_region
      %23 = vsyncadd [#allocation5], 0
      %s24 = sshll.u32 %s1, 4
      %s25 = int_to_ptr.hbm [resolvable:$true] %s24
      %s26 = sshll.u32 [#allocation4], 4
      %s27 = int_to_ptr.vmem [resolvable:$true] %s26
      %32 = dma.hbm_to_vmem [thread:$0]  %s25, 768, %s27, [#allocation5], 128, 128, 8
    $region9: #{net2_forward.1} parent=1 // pred_fallthru
      _
    // Predicated region
    $region10: #{net2_forward.1} parent=1 // pred_check
      _
    $region11: #{net2_forward.1} parent=1 // pred_check_branch
      %34 = sbr.rel (0) target = $region13
    $region12: #{net2_forward.1} parent=1 // pred_region
      %36 = dma.done [#allocation3], 128
    $region13: #{net2_forward.1} parent=1 // pred_fallthru
      _
    // Predicated region
    $region14: #{net2_forward.1} parent=1 // pred_check
      _
    $region15: #{net2_forward.1} parent=1 // pred_check_branch
      %38 = sbr.rel (0) target = $region17
    $region16: #{net2_forward.1} parent=1 // pred_region
      %40 = dma.done [#allocation5], 768
    $region17: #{net2_forward.1} parent=1 // pred_fallthru
      _
    %v41 = vld [vmem:[#allocation4] sm:$0xff]
    %v42 = vld [vmem:[#allocation4 + $0x8] sm:$0xff]
    %v43 = vld [vmem:[#allocation4 + $0x10] sm:$0xff]
    %v44 = vld [vmem:[#allocation4 + $0x18] sm:$0xff]
    %v45 = vld [vmem:[#allocation4 + $0x20] sm:$0xff]
    %v46 = vld [vmem:[#allocation4 + $0x28] sm:$0xff]
    %v47 = vld [vmem:[#allocation2] sm:$0xff]
    %v48 = vperm.slane %v46, 0
    %50 = vset.pattern.permute.xlu0 0
    %51 = vperm.xlu0 %50, %v47
    %v52 = vpop.permute.xlu0 %51
    %v54 = vperm.slane %v41, 0
    %v55 = vmul.f32 %v52, %v54
    %v56 = vadd.f32 %v48, %v55
    %57 = vset.pattern.permute.xlu0 1
    %58 = vperm.xlu0 %57, %v47
    %v59 = vpop.permute.xlu0 %58
    %v61 = vperm.slane %v41, 1
    %v62 = vmul.f32 %v59, %v61
    %v63 = vadd.f32 %v56, %v62
    %64 = vset.pattern.permute.xlu0 2
    %65 = vperm.xlu0 %64, %v47
    %v66 = vpop.permute.xlu0 %65
    %v68 = vperm.slane %v41, 2
    %v69 = vmul.f32 %v66, %v68
    %v70 = vadd.f32 %v63, %v69
    %71 = vset.pattern.permute.xlu0 3
    %72 = vperm.xlu0 %71, %v47
    %v73 = vpop.permute.xlu0 %72
    %v75 = vperm.slane %v41, 3
    %v76 = vmul.f32 %v73, %v75
    %v77 = vadd.f32 %v70, %v76
    %78 = vset.pattern.permute.xlu0 4
    %79 = vperm.xlu0 %78, %v47
    %v80 = vpop.permute.xlu0 %79
    %v82 = vperm.slane %v41, 4
    %v83 = vmul.f32 %v80, %v82
    %v84 = vadd.f32 %v77, %v83
    %85 = vset.pattern.permute.xlu0 5
    %86 = vperm.xlu0 %85, %v47
    %v87 = vpop.permute.xlu0 %86
    %v89 = vperm.slane %v41, 5
    %v90 = vmul.f32 %v87, %v89
    %v91 = vadd.f32 %v84, %v90
    %v92 = vmax.f32 %v91, -30.0
    %v93 = vmin.f32 %v92, 30.0
    %v94 = vsub.f32 0.0, %v93
    %v95 = vmul.f32 %v94, 1.442695
    %v96 = vpow.pop %v95
    %v97 = vadd.f32 %v96, 1.0
    %v98 = vrcp.pop %v97
    %v99 = vmul.f32 %v97, %v98
    %v100 = vsub.f32 2.0, %v99
    %v101 = vmul.f32 %v98, %v100
    %v102 = vperm.slane %v46, 1
    %104 = vset.pattern.permute.xlu0 0
    %105 = vperm.xlu0 %104, %v101
    %v106 = vpop.permute.xlu0 %105
    %v108 = vperm.slane %v42, 0
    %v109 = vmul.f32 %v106, %v108
    %v110 = vadd.f32 %v102, %v109
    %111 = vset.pattern.permute.xlu0 1
    %112 = vperm.xlu0 %111, %v101
    %v113 = vpop.permute.xlu0 %112
    %v115 = vperm.slane %v42, 1
    %v116 = vmul.f32 %v113, %v115
    %v117 = vadd.f32 %v110, %v116
    %118 = vset.pattern.permute.xlu0 2
    %119 = vperm.xlu0 %118, %v101
    %v120 = vpop.permute.xlu0 %119
    %v122 = vperm.slane %v42, 2
    %v123 = vmul.f32 %v120, %v122
    %v124 = vadd.f32 %v117, %v123
    %v125 = vmax.f32 %v124, 0.0
    %v126 = vperm.slane %v46, 2
    %128 = vset.pattern.permute.xlu0 0
    %129 = vperm.xlu0 %128, %v125
    %v130 = vpop.permute.xlu0 %129
    %v132 = vperm.slane %v43, 0
    %v133 = vmul.f32 %v130, %v132
    %v134 = vadd.f32 %v126, %v133
    %135 = vset.pattern.permute.xlu0 1
    %136 = vperm.xlu0 %135, %v125
    %v137 = vpop.permute.xlu0 %136
    %v139 = vperm.slane %v43, 1
    %v140 = vmul.f32 %v137, %v139
    %v141 = vadd.f32 %v134, %v140
    %142 = vset.pattern.permute.xlu0 2
    %143 = vperm.xlu0 %142, %v125
    %v144 = vpop.permute.xlu0 %143
    %v146 = vperm.slane %v43, 2
    %v147 = vmul.f32 %v144, %v146
    %v148 = vadd.f32 %v141, %v147
    %149 = vset.pattern.permute.xlu0 3
    %150 = vperm.xlu0 %149, %v125
    %v151 = vpop.permute.xlu0 %150
    %v153 = vperm.slane %v43, 3
    %v154 = vmul.f32 %v151, %v153
    %v155 = vadd.f32 %v148, %v154
    %v156 = vmax.f32 %v155, -30.0
    %v157 = vmin.f32 %v156, 30.0
    %v158 = vsub.f32 0.0, %v157
    %v159 = vmul.f32 %v158, 1.442695
    %v160 = vpow.pop %v159
    %v161 = vadd.f32 %v160, 1.0
    %v162 = vrcp.pop %v161
    %v163 = vmul.f32 %v161, %v162
    %v164 = vsub.f32 2.0, %v163
    %v165 = vmul.f32 %v162, %v164
    %v166 = vperm.slane %v46, 3
    %168 = vset.pattern.permute.xlu0 0
    %169 = vperm.xlu0 %168, %v165
    %v170 = vpop.permute.xlu0 %169
    %v172 = vperm.slane %v44, 0
    %v173 = vmul.f32 %v170, %v172
    %v174 = vadd.f32 %v166, %v173
    %175 = vset.pattern.permute.xlu0 1
    %176 = vperm.xlu0 %175, %v165
    %v177 = vpop.permute.xlu0 %176
    %v179 = vperm.slane %v44, 1
    %v180 = vmul.f32 %v177, %v179
    %v181 = vadd.f32 %v174, %v180
    %182 = vset.pattern.permute.xlu0 2
    %183 = vperm.xlu0 %182, %v165
    %v184 = vpop.permute.xlu0 %183
    %v186 = vperm.slane %v44, 2
    %v187 = vmul.f32 %v184, %v186
    %v188 = vadd.f32 %v181, %v187
    %189 = vset.pattern.permute.xlu0 3
    %190 = vperm.xlu0 %189, %v165
    %v191 = vpop.permute.xlu0 %190
    %v193 = vperm.slane %v44, 3
    %v194 = vmul.f32 %v191, %v193
    %v195 = vadd.f32 %v188, %v194
    %196 = vset.pattern.permute.xlu0 4
    %197 = vperm.xlu0 %196, %v165
    %v198 = vpop.permute.xlu0 %197
    %v200 = vperm.slane %v44, 4
    %v201 = vmul.f32 %v198, %v200
    %v202 = vadd.f32 %v195, %v201
    %203 = vset.pattern.permute.xlu0 5
    %204 = vperm.xlu0 %203, %v165
    %v205 = vpop.permute.xlu0 %204
    %v207 = vperm.slane %v44, 5
    %v208 = vmul.f32 %v205, %v207
    %v209 = vadd.f32 %v202, %v208
    %210 = vset.pattern.permute.xlu0 6
    %211 = vperm.xlu0 %210, %v165
    %v212 = vpop.permute.xlu0 %211
    %v214 = vperm.slane %v44, 6
    %v215 = vmul.f32 %v212, %v214
    %v216 = vadd.f32 %v209, %v215
    %v217 = vtanh.pop %v216
    %v218 = vperm.slane %v46, 4
    %220 = vset.pattern.permute.xlu0 0
    %221 = vperm.xlu0 %220, %v217
    %v222 = vpop.permute.xlu0 %221
    %v224 = vperm.slane %v45, 0
    %v225 = vmul.f32 %v222, %v224
    %v226 = vadd.f32 %v218, %v225
    %227 = vset.pattern.permute.xlu0 1
    %228 = vperm.xlu0 %227, %v217
    %v229 = vpop.permute.xlu0 %228
    %v231 = vperm.slane %v45, 1
    %v232 = vmul.f32 %v229, %v231
    %v233 = vadd.f32 %v226, %v232
    %234 = vset.pattern.permute.xlu0 2
    %235 = vperm.xlu0 %234, %v217
    %v236 = vpop.permute.xlu0 %235
    %v238 = vperm.slane %v45, 2
    %v239 = vmul.f32 %v236, %v238
    %v240 = vadd.f32 %v233, %v239
    %241 = vset.pattern.permute.xlu0 3
    %242 = vperm.xlu0 %241, %v217
    %v243 = vpop.permute.xlu0 %242
    %v245 = vperm.slane %v45, 3
    %v246 = vmul.f32 %v243, %v245
    %v247 = vadd.f32 %v240, %v246
    %248 = vset.pattern.permute.xlu0 4
    %249 = vperm.xlu0 %248, %v217
    %v250 = vpop.permute.xlu0 %249
    %v252 = vperm.slane %v45, 4
    %v253 = vmul.f32 %v250, %v252
    %v254 = vadd.f32 %v247, %v253
    %255 = vst [vmem:[%s2] sm:$0xff] %v254
    // Predicated region
    $region18: #{net2_forward.1} parent=1 // pred_check
      _
    $region19: #{net2_forward.1} parent=1 // pred_check_branch
      %257 = sbr.rel (0) target = $region21
    $region20: #{net2_forward.1} parent=1 // pred_region
      _
    $region21: #{net2_forward.1} parent=1 // pred_fallthru
      _
    // Predicated region
    $region22: #{net2_forward.1} parent=1 // pred_check
      _
    $region23: #{net2_forward.1} parent=1 // pred_check_branch
      %259 = sbr.rel (0) target = $region25
    $region24: #{net2_forward.1} parent=1 // pred_region
      _
    $region25: #{net2_forward.1} parent=1 // pred_fallthru
      _
    %260 = vsyncpa [#allocation3], 1
    %261 = vsyncpa [#allocation5], 1

</llo_original>
